<compile_context>
chip_gen: v7x
topology: tpu7x:2x2x1
jax: 0.10.0
libtpu: 0.0.40
codegen_flags: <defaults>
</compile_context>

<pallas_src>
import jax
import jax.numpy as jnp
from jax.experimental import pallas as pl
from jax.experimental.pallas import tpu as pltpu


def _transpose_last2(y):
    # Lane-layout-aware minor-dim swap (XLU). Fall back to a plain swapaxes if
    # einshape is unavailable in the installed jax version.
    if hasattr(pltpu, "einshape"):
        return pltpu.einshape("xc->cx", y)
    return jnp.swapaxes(y, 0, 1)


def _permute_scale_kernel(x_ref, scale_ref, o_ref):
    # x_ref:     (HW, C)  NHWC tile for one batch element (batch dim squeezed)
    # scale_ref: (1, C)   per-channel scale (sublane broadcast is free)
    # o_ref:     (C, HW)  NCHW tile for one batch element (batch dim squeezed)
    y = x_ref[...] * scale_ref[...]        # VPU, lane-dense (C on lanes)
    o_ref[...] = _transpose_last2(y)       # NHWC -> NCHW relayout (XLU)


def permute_mul(x_nhwc, layer_scale):
    """x_nhwc: [N, H, W, C]; layer_scale: [C, 1, 1]
    returns: [N, C, H, W] == layer_scale * permute(x, [0, 3, 1, 2])"""
    N, H, W, C = x_nhwc.shape
    HW = H * W
    itemsize = x_nhwc.dtype.itemsize

    x_flat = x_nhwc.reshape(N, HW, C)
    scale_2d = layer_scale.reshape(1, C)

    out_flat = pl.pallas_call(
        _permute_scale_kernel,
        out_shape=jax.ShapeDtypeStruct((N, C, HW), x_nhwc.dtype),
        grid_spec=pltpu.PrefetchScalarGridSpec(
            num_scalar_prefetch=0,
            grid=(N,),  # one step per batch element; do NOT split C or HW here
            in_specs=[
                pl.BlockSpec((None, HW, C), lambda n: (n, 0, 0)),
                pl.BlockSpec((1, C), lambda n: (0, 0)),
            ],
            out_specs=pl.BlockSpec((None, C, HW), lambda n: (n, 0, 0)),
        ),
        compiler_params=pltpu.CompilerParams(
            # shards batch elements across TensorCores when N > 1 (v7x megacore)
            dimension_semantics=("parallel",),
        ),
        cost_estimate=pl.CostEstimate(
            flops=N * HW * C,
            transcendentals=0,
            bytes_accessed=2 * N * HW * C * itemsize + C * itemsize,
        ),
    )(x_flat, scale_2d)

    return out_flat.reshape(N, C, H, W)


if __name__ == "__main__":
    key = jax.random.PRNGKey(0)
    k_x, k_s = jax.random.split(key)

    # Shapes implied by the module: x196 = [1, 7, 7, 768], layer_scale = [768, 1, 1]
    N, H, W, C = 1, 7, 7, 768
    x = jax.random.normal(k_x, (N, H, W, C), dtype=jnp.float32)
    layer_scale = jax.random.uniform(k_s, (C, 1, 1), dtype=jnp.float32)

    out = jax.block_until_ready(permute_mul(x, layer_scale))

    # Reference check (pure JAX)
    ref = layer_scale[None, :, :, :] * jnp.transpose(x, (0, 3, 1, 2))
    assert out.shape == (N, C, H, W)
    assert jnp.allclose(out, ref, atol=1e-6, rtol=1e-6)

    print("KERNEL_OK")
</pallas_src>

<mosaic_0001>
module attributes {stable_mosaic.version = 11 : i64} {
  func.func @_permute_scale_kernel(%arg0: i32, %arg1: memref<1x49x768xf32, #tpu.memory_space<vmem>>, %arg2: memref<1x768xf32, #tpu.memory_space<vmem>>, %arg3: memref<1x768x49xf32, #tpu.memory_space<vmem>>) attributes {dimension_semantics = [#tpu.dimension_semantics<parallel>], iteration_bounds = array<i64: 1>, scalar_prefetch = 0 : i64, scratch_operands = 0 : i64, tpu.core_type = #tpu.core_type<tc>, window_params = [{transform_indices = @transform_0, window_bounds = array<i64: 1, 49, 768>}, {pipeline_mode = #tpu.pipeline_mode<synchronous>, transform_indices = @transform_1, window_bounds = array<i64: 1, 768>}, {transform_indices = @transform_2, window_bounds = array<i64: 1, 768, 49>}]} {
    %c0 = arith.constant 0 : index
    %c0_0 = arith.constant 0 : index
    %c0_1 = arith.constant 0 : index
    %0 = vector.load %arg1[%c0, %c0_0, %c0_1] : memref<1x49x768xf32, #tpu.memory_space<vmem>>, vector<1x49x768xf32>
    %1 = vector.shape_cast %0 : vector<1x49x768xf32> to vector<49x768xf32>
    %c0_2 = arith.constant 0 : index
    %c0_3 = arith.constant 0 : index
    %2 = vector.load %arg2[%c0_2, %c0_3] : memref<1x768xf32, #tpu.memory_space<vmem>>, vector<1x768xf32>
    %3 = vector.broadcast %2 : vector<1x768xf32> to vector<49x768xf32>
    %4 = arith.mulf %1, %3 : vector<49x768xf32>
    %5 = tpu.transpose %4, [1, 0] : vector<49x768xf32> -> vector<768x49xf32>
    %c0_4 = arith.constant 0 : index
    %c0_5 = arith.constant 0 : index
    %c0_6 = arith.constant 0 : index
    %6 = vector.load %arg3[%c0_4, %c0_5, %c0_6] : memref<1x768x49xf32, #tpu.memory_space<vmem>>, vector<1x768x49xf32>
    %7 = vector.shape_cast %6 : vector<1x768x49xf32> to vector<768x49xf32>
    %8 = vector.shape_cast %5 : vector<768x49xf32> to vector<1x768x49xf32>
    tpu.vector_store %arg3[%c0_4, %c0_5, %c0_6], %8 {strides = array<i32>} : memref<1x768x49xf32, #tpu.memory_space<vmem>>, vector<1x768x49xf32>,
    return
  }
  func.func @transform_0(%arg0: i32) -> (i32, i32, i32) {
    %c0_i32 = arith.constant 0 : i32
    %c0_i32_0 = arith.constant 0 : i32
    %c0_i32_1 = arith.constant 0 : i32
    return %arg0, %c0_i32, %c0_i32_0 : i32, i32, i32
  }
  func.func @transform_1(%arg0: i32) -> (i32, i32) {
    %c0_i32 = arith.constant 0 : i32
    %c0_i32_0 = arith.constant 0 : i32
    %c0_i32_1 = arith.constant 0 : i32
    return %c0_i32, %c0_i32_0 : i32, i32
  }
  func.func @transform_2(%arg0: i32) -> (i32, i32, i32) {
    %c0_i32 = arith.constant 0 : i32
    %c0_i32_0 = arith.constant 0 : i32
    %c0_i32_1 = arith.constant 0 : i32
    return %arg0, %c0_i32, %c0_i32_0 : i32, i32, i32
  }
}

</mosaic_0001>

<llo_original>
// kernel: tpu_custom_call.1
$region0: #{tpu_custom_call.1}
  #allocation0 [shape = 'u32[]', space=smem, size = 0x4, offset = 0x4, fixed_abs, tag = 'smem constant byte address 0x4 - core index']
  #allocation1 [shape = 'u32[144,128]{1,0:T(1,128)}', space=vmem, size = 0x12000, scoped, tag = 'internal scratch']
  %s0 = inlined_call_operand.vmem [shape: f32[1,49,768], index: 0, kind: input, shape index: {}]
  %s1 = inlined_call_operand.vmem [shape: f32[1,768], index: 1, kind: input, shape index: {}]
  %s2 = inlined_call_operand.vmem [shape: f32[1,768,49], index: 2, kind: output, shape index: {}]
  %s3 = sld [smem:[#allocation0]]
  $region18: #{tpu_custom_call.1} parent=0
    _
  %s5 = ssub.s32 1, %s3
  %s6 = scalar_select 0, %s5, %s3
  // Predicated region
  $region2: #{tpu_custom_call.1} parent=0 // pred_check
    _
  $region3: #{tpu_custom_call.1} parent=0 // pred_check_branch
    %8 = sbr.rel (0) target = $region5
  $region4: #{tpu_custom_call.1} parent=0 // pred_region
    _
  $region5: #{tpu_custom_call.1} parent=0 // pred_fallthru
    _
  // Predicated region
  $region6: #{tpu_custom_call.1} parent=0 // pred_check
    _
  $region7: #{tpu_custom_call.1} parent=0 // pred_check_branch
    %10 = sbr.rel (0) target = $region9
  $region8: #{tpu_custom_call.1} parent=0 // pred_region
    _
  $region9: #{tpu_custom_call.1} parent=0 // pred_fallthru
    _
  %v11 = vld [vmem:[%s0] sm:$0xff]
  %v12 = vld [vmem:[%s0 + $0x8] sm:$0xff]
  %v13 = vld [vmem:[%s0 + $0x10] sm:$0xff]
  %v14 = vld [vmem:[%s0 + $0x18] sm:$0xff]
  %v15 = vld [vmem:[%s0 + $0x20] sm:$0xff]
  %v16 = vld [vmem:[%s0 + $0x28] sm:$0xff]
  %v17 = vld [vmem:[%s0 + $0x30] sm:$0xff]
  %v18 = vld [vmem:[%s0 + $0x38] sm:$0xff]
  %v19 = vld [vmem:[%s0 + $0x40] sm:$0xff]
  %v20 = vld [vmem:[%s0 + $0x48] sm:$0xff]
  %v21 = vld [vmem:[%s0 + $0x50] sm:$0xff]
  %v22 = vld [vmem:[%s0 + $0x58] sm:$0xff]
  %v23 = vld [vmem:[%s0 + $0x60] sm:$0xff]
  %v24 = vld [vmem:[%s0 + $0x68] sm:$0xff]
  %v25 = vld [vmem:[%s0 + $0x70] sm:$0xff]
  %v26 = vld [vmem:[%s0 + $0x78] sm:$0xff]
  %v27 = vld [vmem:[%s0 + $0x80] sm:$0xff]
  %v28 = vld [vmem:[%s0 + $0x88] sm:$0xff]
  %v29 = vld [vmem:[%s0 + $0x90] sm:$0xff]
  %v30 = vld [vmem:[%s0 + $0x98] sm:$0xff]
  %v31 = vld [vmem:[%s0 + $0xa0] sm:$0xff]
  %v32 = vld [vmem:[%s0 + $0xa8] sm:$0xff]
  %v33 = vld [vmem:[%s0 + $0xb0] sm:$0xff]
  %v34 = vld [vmem:[%s0 + $0xb8] sm:$0xff]
  %v35 = vld [vmem:[%s0 + $0xc0] sm:$0xff]
  %v36 = vld [vmem:[%s0 + $0xc8] sm:$0xff]
  %v37 = vld [vmem:[%s0 + $0xd0] sm:$0xff]
  %v38 = vld [vmem:[%s0 + $0xd8] sm:$0xff]
  %v39 = vld [vmem:[%s0 + $0xe0] sm:$0xff]
  %v40 = vld [vmem:[%s0 + $0xe8] sm:$0xff]
  %v41 = vld [vmem:[%s0 + $0xf0] sm:$0xff]
  %v42 = vld [vmem:[%s0 + $0xf8] sm:$0xff]
  %v43 = vld [vmem:[%s0 + $0x100] sm:$0xff]
  %v44 = vld [vmem:[%s0 + $0x108] sm:$0xff]
  %v45 = vld [vmem:[%s0 + $0x110] sm:$0xff]
  %v46 = vld [vmem:[%s0 + $0x118] sm:$0xff]
  %v47 = vld [vmem:[%s0 + $0x120] sm:$0x1]
  %v48 = vld [vmem:[%s0 + $0x128] sm:$0x1]
  %v49 = vld [vmem:[%s0 + $0x130] sm:$0x1]
  %v50 = vld [vmem:[%s0 + $0x138] sm:$0x1]
  %v51 = vld [vmem:[%s0 + $0x140] sm:$0x1]
  %v52 = vld [vmem:[%s0 + $0x148] sm:$0x1]
  %v53 = vld [vmem:[%s1] sm:$0x3f]
  %v55 = vlaneseq
  %v56 = vshrl.u32 %v55, 7
  %v57 = vsub.s32 0, %v56
  %v58 = vrot.slane %v53, %v57
  %v59 = vlaneseq
  %v60 = vshrl.u32 %v59, 7
  %v61 = vsub.s32 1, %v60
  %v62 = vrot.slane %v53, %v61
  %v63 = vlaneseq
  %v64 = vshrl.u32 %v63, 7
  %v65 = vsub.s32 2, %v64
  %v66 = vrot.slane %v53, %v65
  %v67 = vlaneseq
  %v68 = vshrl.u32 %v67, 7
  %v69 = vsub.s32 3, %v68
  %v70 = vrot.slane %v53, %v69
  %v71 = vlaneseq
  %v72 = vshrl.u32 %v71, 7
  %v73 = vsub.s32 4, %v72
  %v74 = vrot.slane %v53, %v73
  %v75 = vlaneseq
  %v76 = vshrl.u32 %v75, 7
  %v77 = vsub.s32 5, %v76
  %v78 = vrot.slane %v53, %v77
  %v85 = vmul.f32 %v11, %v58
  %v86 = vmul.f32 %v12, %v62
  %v87 = vmul.f32 %v13, %v66
  %v88 = vmul.f32 %v14, %v70
  %v89 = vmul.f32 %v15, %v74
  %v90 = vmul.f32 %v16, %v78
  %v91 = vmul.f32 %v17, %v58
  %v92 = vmul.f32 %v18, %v62
  %v93 = vmul.f32 %v19, %v66
  %v94 = vmul.f32 %v20, %v70
  %v95 = vmul.f32 %v21, %v74
  %v96 = vmul.f32 %v22, %v78
  %v97 = vmul.f32 %v23, %v58
  %v98 = vmul.f32 %v24, %v62
  %v99 = vmul.f32 %v25, %v66
  %v100 = vmul.f32 %v26, %v70
  %v101 = vmul.f32 %v27, %v74
  %v102 = vmul.f32 %v28, %v78
  %v103 = vmul.f32 %v29, %v58
  %v104 = vmul.f32 %v30, %v62
  %v105 = vmul.f32 %v31, %v66
  %v106 = vmul.f32 %v32, %v70
  %v107 = vmul.f32 %v33, %v74
  %v108 = vmul.f32 %v34, %v78
  %v109 = vmul.f32 %v35, %v58
  %v110 = vmul.f32 %v36, %v62
  %v111 = vmul.f32 %v37, %v66
  %v112 = vmul.f32 %v38, %v70
  %v113 = vmul.f32 %v39, %v74
  %v114 = vmul.f32 %v40, %v78
  %v115 = vmul.f32 %v41, %v58
  %v116 = vmul.f32 %v42, %v62
  %v117 = vmul.f32 %v43, %v66
  %v118 = vmul.f32 %v44, %v70
  %v119 = vmul.f32 %v45, %v74
  %v120 = vmul.f32 %v46, %v78
  %v121 = vmul.f32 %v47, %v58
  %v122 = vmul.f32 %v48, %v62
  %v123 = vmul.f32 %v49, %v66
  %v124 = vmul.f32 %v50, %v70
  %v125 = vmul.f32 %v51, %v74
  %v126 = vmul.f32 %v52, %v78
  %127 = vxpose.xlu0.b32.start [1/16] %v85, 128
  %128 = vxpose.xlu0.b32.cont [2/16] %v91, 128
  %129 = vxpose.xlu0.b32.cont [3/16] %v97, 128
  %130 = vxpose.xlu0.b32.cont [4/16] %v103, 128
  %131 = vxpose.xlu0.b32.cont [5/16] %v109, 128
  %132 = vxpose.xlu0.b32.cont [6/16] %v115, 128
  %133 = vxpose.xlu0.b32.cont [7/16] %v121, 128
  %134 = vxpose.xlu0.b32.cont [8/16] 0.0, 128
  %135 = vxpose.xlu0.b32.cont [9/16] 0.0, 128
  %136 = vxpose.xlu0.b32.cont [10/16] 0.0, 128
  %137 = vxpose.xlu0.b32.cont [11/16] 0.0, 128
  %138 = vxpose.xlu0.b32.cont [12/16] 0.0, 128
  %139 = vxpose.xlu0.b32.cont [13/16] 0.0, 128
  %140 = vxpose.xlu0.b32.cont [14/16] 0.0, 128
  %141 = vxpose.xlu0.b32.cont [15/16] 0.0, 128
  %142 = vxpose.xlu0.b32.end [16/16] 0.0, 128
  %v143 = vpop.trf.xlu0
  %v144 = vpop.trf.xlu0
  %v145 = vpop.trf.xlu0
  %v146 = vpop.trf.xlu0
  %v147 = vpop.trf.xlu0
  %v148 = vpop.trf.xlu0
  %v149 = vpop.trf.xlu0
  %v150 = vpop.trf.xlu0
  %v151 = vpop.trf.xlu0
  %v152 = vpop.trf.xlu0
  %v153 = vpop.trf.xlu0
  %v154 = vpop.trf.xlu0
  %v155 = vpop.trf.xlu0
  %v156 = vpop.trf.xlu0
  %v157 = vpop.trf.xlu0
  %v158 = vpop.trf.xlu0
  %159 = vxpose.xlu0.b32.start [1/16] %v86, 128
  %160 = vxpose.xlu0.b32.cont [2/16] %v92, 128
  %161 = vxpose.xlu0.b32.cont [3/16] %v98, 128
  %162 = vxpose.xlu0.b32.cont [4/16] %v104, 128
  %163 = vxpose.xlu0.b32.cont [5/16] %v110, 128
  %164 = vxpose.xlu0.b32.cont [6/16] %v116, 128
  %165 = vxpose.xlu0.b32.cont [7/16] %v122, 128
  %166 = vxpose.xlu0.b32.cont [8/16] 0.0, 128
  %167 = vxpose.xlu0.b32.cont [9/16] 0.0, 128
  %168 = vxpose.xlu0.b32.cont [10/16] 0.0, 128
  %169 = vxpose.xlu0.b32.cont [11/16] 0.0, 128
  %170 = vxpose.xlu0.b32.cont [12/16] 0.0, 128
  %171 = vxpose.xlu0.b32.cont [13/16] 0.0, 128
  %172 = vxpose.xlu0.b32.cont [14/16] 0.0, 128
  %173 = vxpose.xlu0.b32.cont [15/16] 0.0, 128
  %174 = vxpose.xlu0.b32.end [16/16] 0.0, 128
  %v175 = vpop.trf.xlu0
  %v176 = vpop.trf.xlu0
  %v177 = vpop.trf.xlu0
  %v178 = vpop.trf.xlu0
  %v179 = vpop.trf.xlu0
  %v180 = vpop.trf.xlu0
  %v181 = vpop.trf.xlu0
  %v182 = vpop.trf.xlu0
  %v183 = vpop.trf.xlu0
  %v184 = vpop.trf.xlu0
  %v185 = vpop.trf.xlu0
  %v186 = vpop.trf.xlu0
  %v187 = vpop.trf.xlu0
  %v188 = vpop.trf.xlu0
  %v189 = vpop.trf.xlu0
  %v190 = vpop.trf.xlu0
  %191 = vxpose.xlu0.b32.start [1/16] %v87, 128
  %192 = vxpose.xlu0.b32.cont [2/16] %v93, 128
  %193 = vxpose.xlu0.b32.cont [3/16] %v99, 128
  %194 = vxpose.xlu0.b32.cont [4/16] %v105, 128
  %195 = vxpose.xlu0.b32.cont [5/16] %v111, 128
  %196 = vxpose.xlu0.b32.cont [6/16] %v117, 128
  %197 = vxpose.xlu0.b32.cont [7/16] %v123, 128
  %198 = vxpose.xlu0.b32.cont [8/16] 0.0, 128
  %199 = vxpose.xlu0.b32.cont [9/16] 0.0, 128
  %200 = vxpose.xlu0.b32.cont [10/16] 0.0, 128
  %201 = vxpose.xlu0.b32.cont [11/16] 0.0, 128
  %202 = vxpose.xlu0.b32.cont [12/16] 0.0, 128
  %203 = vxpose.xlu0.b32.cont [13/16] 0.0, 128
  %204 = vxpose.xlu0.b32.cont [14/16] 0.0, 128
  %205 = vxpose.xlu0.b32.cont [15/16] 0.0, 128
  %206 = vxpose.xlu0.b32.end [16/16] 0.0, 128
  %v207 = vpop.trf.xlu0
  %v208 = vpop.trf.xlu0
  %v209 = vpop.trf.xlu0
  %v210 = vpop.trf.xlu0
  %v211 = vpop.trf.xlu0
  %v212 = vpop.trf.xlu0
  %v213 = vpop.trf.xlu0
  %v214 = vpop.trf.xlu0
  %v215 = vpop.trf.xlu0
  %v216 = vpop.trf.xlu0
  %v217 = vpop.trf.xlu0
  %v218 = vpop.trf.xlu0
  %v219 = vpop.trf.xlu0
  %v220 = vpop.trf.xlu0
  %v221 = vpop.trf.xlu0
  %v222 = vpop.trf.xlu0
  %223 = vxpose.xlu0.b32.start [1/16] %v88, 128
  %224 = vxpose.xlu0.b32.cont [2/16] %v94, 128
  %225 = vxpose.xlu0.b32.cont [3/16] %v100, 128
  %226 = vxpose.xlu0.b32.cont [4/16] %v106, 128
  %227 = vxpose.xlu0.b32.cont [5/16] %v112, 128
  %228 = vxpose.xlu0.b32.cont [6/16] %v118, 128
  %229 = vxpose.xlu0.b32.cont [7/16] %v124, 128
  %230 = vxpose.xlu0.b32.cont [8/16] 0.0, 128
  %231 = vxpose.xlu0.b32.cont [9/16] 0.0, 128
  %232 = vxpose.xlu0.b32.cont [10/16] 0.0, 128
  %233 = vxpose.xlu0.b32.cont [11/16] 0.0, 128
  %234 = vxpose.xlu0.b32.cont [12/16] 0.0, 128
  %235 = vxpose.xlu0.b32.cont [13/16] 0.0, 128
  %236 = vxpose.xlu0.b32.cont [14/16] 0.0, 128
  %237 = vxpose.xlu0.b32.cont [15/16] 0.0, 128
  %238 = vxpose.xlu0.b32.end [16/16] 0.0, 128
  %v239 = vpop.trf.xlu0
  %v240 = vpop.trf.xlu0
  %v241 = vpop.trf.xlu0
  %v242 = vpop.trf.xlu0
  %v243 = vpop.trf.xlu0
  %v244 = vpop.trf.xlu0
  %v245 = vpop.trf.xlu0
  %v246 = vpop.trf.xlu0
  %v247 = vpop.trf.xlu0
  %v248 = vpop.trf.xlu0
  %v249 = vpop.trf.xlu0
  %v250 = vpop.trf.xlu0
  %v251 = vpop.trf.xlu0
  %v252 = vpop.trf.xlu0
  %v253 = vpop.trf.xlu0
  %v254 = vpop.trf.xlu0
  %255 = vxpose.xlu0.b32.start [1/16] %v89, 128
  %256 = vxpose.xlu0.b32.cont [2/16] %v95, 128
  %257 = vxpose.xlu0.b32.cont [3/16] %v101, 128
  %258 = vxpose.xlu0.b32.cont [4/16] %v107, 128
  %259 = vxpose.xlu0.b32.cont [5/16] %v113, 128
  %260 = vxpose.xlu0.b32.cont [6/16] %v119, 128
  %261 = vxpose.xlu0.b32.cont [7/16] %v125, 128
  %262 = vxpose.xlu0.b32.cont [8/16] 0.0, 128
  %263 = vxpose.xlu0.b32.cont [9/16] 0.0, 128
  %264 = vxpose.xlu0.b32.cont [10/16] 0.0, 128
  %265 = vxpose.xlu0.b32.cont [11/16] 0.0, 128
  %266 = vxpose.xlu0.b32.cont [12/16] 0.0, 128
  %267 = vxpose.xlu0.b32.cont [13/16] 0.0, 128
  %268 = vxpose.xlu0.b32.cont [14/16] 0.0, 128
  %269 = vxpose.xlu0.b32.cont [15/16] 0.0, 128
  %270 = vxpose.xlu0.b32.end [16/16] 0.0, 128
  %v271 = vpop.trf.xlu0
  %v272 = vpop.trf.xlu0
  %v273 = vpop.trf.xlu0
  %v274 = vpop.trf.xlu0
  %v275 = vpop.trf.xlu0
  %v276 = vpop.trf.xlu0
  %v277 = vpop.trf.xlu0
  %v278 = vpop.trf.xlu0
  %v279 = vpop.trf.xlu0
  %v280 = vpop.trf.xlu0
  %v281 = vpop.trf.xlu0
  %v282 = vpop.trf.xlu0
  %v283 = vpop.trf.xlu0
  %v284 = vpop.trf.xlu0
  %v285 = vpop.trf.xlu0
  %v286 = vpop.trf.xlu0
  %287 = vxpose.xlu0.b32.start [1/16] %v90, 128
  %288 = vxpose.xlu0.b32.cont [2/16] %v96, 128
  %289 = vxpose.xlu0.b32.cont [3/16] %v102, 128
  %290 = vxpose.xlu0.b32.cont [4/16] %v108, 128
  %291 = vxpose.xlu0.b32.cont [5/16] %v114, 128
  %292 = vxpose.xlu0.b32.cont [6/16] %v120, 128
  %293 = vxpose.xlu0.b32.cont [7/16] %v126, 128
  %294 = vxpose.xlu0.b32.cont [8/16] 0.0, 128
  %295 = vxpose.xlu0.b32.cont [9/16] 0.0, 128
  %296 = vxpose.xlu0.b32.cont [10/16] 0.0, 128
  %297 = vxpose.xlu0.b32.cont [11/16] 0.0, 128
  %298 = vxpose.xlu0.b32.cont [12/16] 0.0, 128
  %299 = vxpose.xlu0.b32.cont [13/16] 0.0, 128
  %300 = vxpose.xlu0.b32.cont [14/16] 0.0, 128
  %301 = vxpose.xlu0.b32.cont [15/16] 0.0, 128
  %302 = vxpose.xlu0.b32.end [16/16] 0.0, 128
  %v303 = vpop.trf.xlu0
  %v304 = vpop.trf.xlu0
  %v305 = vpop.trf.xlu0
  %v306 = vpop.trf.xlu0
  %v307 = vpop.trf.xlu0
  %v308 = vpop.trf.xlu0
  %v309 = vpop.trf.xlu0
  %v310 = vpop.trf.xlu0
  %v311 = vpop.trf.xlu0
  %v312 = vpop.trf.xlu0
  %v313 = vpop.trf.xlu0
  %v314 = vpop.trf.xlu0
  %v315 = vpop.trf.xlu0
  %v316 = vpop.trf.xlu0
  %v317 = vpop.trf.xlu0
  %v318 = vpop.trf.xlu0
  %vm319 = vcmask 400384
  %320 = vst.msk [vmem:[%s2] sm:$0xff] %vm319, %v143
  %321 = vst.msk [vmem:[%s2 + $0x8] sm:$0xff] %vm319, %v144
  %322 = vst.msk [vmem:[%s2 + $0x10] sm:$0xff] %vm319, %v145
  %323 = vst.msk [vmem:[%s2 + $0x18] sm:$0xff] %vm319, %v146
  %324 = vst.msk [vmem:[%s2 + $0x20] sm:$0xff] %vm319, %v147
  %325 = vst.msk [vmem:[%s2 + $0x28] sm:$0xff] %vm319, %v148
  %326 = vst.msk [vmem:[%s2 + $0x30] sm:$0xff] %vm319, %v149
  %327 = vst.msk [vmem:[%s2 + $0x38] sm:$0xff] %vm319, %v150
  %328 = vst.msk [vmem:[%s2 + $0x40] sm:$0xff] %vm319, %v151
  %329 = vst.msk [vmem:[%s2 + $0x48] sm:$0xff] %vm319, %v152
  %330 = vst.msk [vmem:[%s2 + $0x50] sm:$0xff] %vm319, %v153
  %331 = vst.msk [vmem:[%s2 + $0x58] sm:$0xff] %vm319, %v154
  %332 = vst.msk [vmem:[%s2 + $0x60] sm:$0xff] %vm319, %v155
  %333 = vst.msk [vmem:[%s2 + $0x68] sm:$0xff] %vm319, %v156
  %334 = vst.msk [vmem:[%s2 + $0x70] sm:$0xff] %vm319, %v157
  %335 = vst.msk [vmem:[%s2 + $0x78] sm:$0xff] %vm319, %v158
  %336 = vst.msk [vmem:[%s2 + $0x80] sm:$0xff] %vm319, %v175
  %337 = vst.msk [vmem:[%s2 + $0x88] sm:$0xff] %vm319, %v176
  %338 = vst.msk [vmem:[%s2 + $0x90] sm:$0xff] %vm319, %v177
  %339 = vst.msk [vmem:[%s2 + $0x98] sm:$0xff] %vm319, %v178
  %340 = vst.msk [vmem:[%s2 + $0xa0] sm:$0xff] %vm319, %v179
  %341 = vst.msk [vmem:[%s2 + $0xa8] sm:$0xff] %vm319, %v180
  %342 = vst.msk [vmem:[%s2 + $0xb0] sm:$0xff] %vm319, %v181
  %343 = vst.msk [vmem:[%s2 + $0xb8] sm:$0xff] %vm319, %v182
  %344 = vst.msk [vmem:[%s2 + $0xc0] sm:$0xff] %vm319, %v183
  %345 = vst.msk [vmem:[%s2 + $0xc8] sm:$0xff] %vm319, %v184
  %346 = vst.msk [vmem:[%s2 + $0xd0] sm:$0xff] %vm319, %v185
  %347 = vst.msk [vmem:[%s2 + $0xd8] sm:$0xff] %vm319, %v186
  %348 = vst.msk [vmem:[%s2 + $0xe0] sm:$0xff] %vm319, %v187
  %349 = vst.msk [vmem:[%s2 + $0xe8] sm:$0xff] %vm319, %v188
  %350 = vst.msk [vmem:[%s2 + $0xf0] sm:$0xff] %vm319, %v189
  %351 = vst.msk [vmem:[%s2 + $0xf8] sm:$0xff] %vm319, %v190
  %352 = vst.msk [vmem:[%s2 + $0x100] sm:$0xff] %vm319, %v207
  %353 = vst.msk [vmem:[%s2 + $0x108] sm:$0xff] %vm319, %v208
  %354 = vst.msk [vmem:[%s2 + $0x110] sm:$0xff] %vm319, %v209
  %355 = vst.msk [vmem:[%s2 + $0x118] sm:$0xff] %vm319, %v210
  %356 = vst.msk [vmem:[%s2 + $0x120] sm:$0xff] %vm319, %v211
  %357 = vst.msk [vmem:[%s2 + $0x128] sm:$0xff] %vm319, %v212
  %358 = vst.msk [vmem:[%s2 + $0x130] sm:$0xff] %vm319, %v213
  %359 = vst.msk [vmem:[%s2 + $0x138] sm:$0xff] %vm319, %v214
  %360 = vst.msk [vmem:[%s2 + $0x140] sm:$0xff] %vm319, %v215
  %361 = vst.msk [vmem:[%s2 + $0x148] sm:$0xff] %vm319, %v216
  %362 = vst.msk [vmem:[%s2 + $0x150] sm:$0xff] %vm319, %v217
  %363 = vst.msk [vmem:[%s2 + $0x158] sm:$0xff] %vm319, %v218
  %364 = vst.msk [vmem:[%s2 + $0x160] sm:$0xff] %vm319, %v219
  %365 = vst.msk [vmem:[%s2 + $0x168] sm:$0xff] %vm319, %v220
  %366 = vst.msk [vmem:[%s2 + $0x170] sm:$0xff] %vm319, %v221
  %367 = vst.msk [vmem:[%s2 + $0x178] sm:$0xff] %vm319, %v222
  %368 = vst.msk [vmem:[%s2 + $0x180] sm:$0xff] %vm319, %v239
  %369 = vst.msk [vmem:[%s2 + $0x188] sm:$0xff] %vm319, %v240
  %370 = vst.msk [vmem:[%s2 + $0x190] sm:$0xff] %vm319, %v241
  %371 = vst.msk [vmem:[%s2 + $0x198] sm:$0xff] %vm319, %v242
  %372 = vst.msk [vmem:[%s2 + $0x1a0] sm:$0xff] %vm319, %v243
  %373 = vst.msk [vmem:[%s2 + $0x1a8] sm:$0xff] %vm319, %v244
  %374 = vst.msk [vmem:[%s2 + $0x1b0] sm:$0xff] %vm319, %v245
  %375 = vst.msk [vmem:[%s2 + $0x1b8] sm:$0xff] %vm319, %v246
  %376 = vst.msk [vmem:[%s2 + $0x1c0] sm:$0xff] %vm319, %v247
  %377 = vst.msk [vmem:[%s2 + $0x1c8] sm:$0xff] %vm319, %v248
  %378 = vst.msk [vmem:[%s2 + $0x1d0] sm:$0xff] %vm319, %v249
  %379 = vst.msk [vmem:[%s2 + $0x1d8] sm:$0xff] %vm319, %v250
  %380 = vst.msk [vmem:[%s2 + $0x1e0] sm:$0xff] %vm319, %v251
  %381 = vst.msk [vmem:[%s2 + $0x1e8] sm:$0xff] %vm319, %v252
  %382 = vst.msk [vmem:[%s2 + $0x1f0] sm:$0xff] %vm319, %v253
  %383 = vst.msk [vmem:[%s2 + $0x1f8] sm:$0xff] %vm319, %v254
  %384 = vst.msk [vmem:[%s2 + $0x200] sm:$0xff] %vm319, %v271
  %385 = vst.msk [vmem:[%s2 + $0x208] sm:$0xff] %vm319, %v272
  %386 = vst.msk [vmem:[%s2 + $0x210] sm:$0xff] %vm319, %v273
  %387 = vst.msk [vmem:[%s2 + $0x218] sm:$0xff] %vm319, %v274
  %388 = vst.msk [vmem:[%s2 + $0x220] sm:$0xff] %vm319, %v275
  %389 = vst.msk [vmem:[%s2 + $0x228] sm:$0xff] %vm319, %v276
  %390 = vst.msk [vmem:[%s2 + $0x230] sm:$0xff] %vm319, %v277
  %391 = vst.msk [vmem:[%s2 + $0x238] sm:$0xff] %vm319, %v278
  %392 = vst.msk [vmem:[%s2 + $0x240] sm:$0xff] %vm319, %v279
  %393 = vst.msk [vmem:[%s2 + $0x248] sm:$0xff] %vm319, %v280
  %394 = vst.msk [vmem:[%s2 + $0x250] sm:$0xff] %vm319, %v281
  %395 = vst.msk [vmem:[%s2 + $0x258] sm:$0xff] %vm319, %v282
  %396 = vst.msk [vmem:[%s2 + $0x260] sm:$0xff] %vm319, %v283
  %397 = vst.msk [vmem:[%s2 + $0x268] sm:$0xff] %vm319, %v284
  %398 = vst.msk [vmem:[%s2 + $0x270] sm:$0xff] %vm319, %v285
  %399 = vst.msk [vmem:[%s2 + $0x278] sm:$0xff] %vm319, %v286
  %400 = vst.msk [vmem:[%s2 + $0x280] sm:$0xff] %vm319, %v303
  %401 = vst.msk [vmem:[%s2 + $0x288] sm:$0xff] %vm319, %v304
  %402 = vst.msk [vmem:[%s2 + $0x290] sm:$0xff] %vm319, %v305
  %403 = vst.msk [vmem:[%s2 + $0x298] sm:$0xff] %vm319, %v306
  %404 = vst.msk [vmem:[%s2 + $0x2a0] sm:$0xff] %vm319, %v307
  %405 = vst.msk [vmem:[%s2 + $0x2a8] sm:$0xff] %vm319, %v308
  %406 = vst.msk [vmem:[%s2 + $0x2b0] sm:$0xff] %vm319, %v309
  %407 = vst.msk [vmem:[%s2 + $0x2b8] sm:$0xff] %vm319, %v310
  %408 = vst.msk [vmem:[%s2 + $0x2c0] sm:$0xff] %vm319, %v311
  %409 = vst.msk [vmem:[%s2 + $0x2c8] sm:$0xff] %vm319, %v312
  %410 = vst.msk [vmem:[%s2 + $0x2d0] sm:$0xff] %vm319, %v313
  %411 = vst.msk [vmem:[%s2 + $0x2d8] sm:$0xff] %vm319, %v314
  %412 = vst.msk [vmem:[%s2 + $0x2e0] sm:$0xff] %vm319, %v315
  %413 = vst.msk [vmem:[%s2 + $0x2e8] sm:$0xff] %vm319, %v316
  %414 = vst.msk [vmem:[%s2 + $0x2f0] sm:$0xff] %vm319, %v317
  %415 = vst.msk [vmem:[%s2 + $0x2f8] sm:$0xff] %vm319, %v318
  // Predicated region
  $region10: #{tpu_custom_call.1} parent=0 // pred_check
    _
  $region11: #{tpu_custom_call.1} parent=0 // pred_check_branch
    %417 = sbr.rel (0) target = $region13
  $region12: #{tpu_custom_call.1} parent=0 // pred_region
    _
  $region13: #{tpu_custom_call.1} parent=0 // pred_fallthru
    _
  // Predicated region
  $region14: #{tpu_custom_call.1} parent=0 // pred_check
    _
  $region15: #{tpu_custom_call.1} parent=0 // pred_check_branch
    %419 = sbr.rel (0) target = $region17
  $region16: #{tpu_custom_call.1} parent=0 // pred_region
    _
  $region17: #{tpu_custom_call.1} parent=0 // pred_fallthru
    _

</llo_original>
